<compile_context>
chip_gen: v6e
topology: v6e:2x2x1
jax: 0.10.0
libtpu: 0.0.40
codegen_flags: <defaults>
</compile_context>

<pallas_src>
import jax
import jax.numpy as jnp
from jax import lax
from jax.experimental import pallas as pl
from jax.experimental.pallas import tpu as pltpu


# ------------------------------ helpers --------------------------------------

def _round_up(x, m):
    return (x + m - 1) // m * m


def _vmem_budget_bytes():
    """Largest table (bytes) eligible for the VMEM-resident path.

    The table is single-buffered (constant block index + pl.Buffered(1)), so
    roughly half the per-core VMEM can hold it; the rest is output tiles +
    compiler scratch.  cap//2 -> ~32 MiB on v7x (64 MiB/core), ~64 MiB on
    v5e/v6e (128 MiB/core)."""
    try:
        cap = pltpu.get_tpu_info().vmem_capacity_bytes
    except Exception:
        cap = 64 * 1024 * 1024  # conservative: v7x physical VMEM per core
    return cap // 2


# ------------------- Path 2: table resident in VMEM --------------------------

def _gather_resident(weight, rows, tile_b):
    """rows are absolute, in-bounds table rows; rows.shape[0] % tile_b == 0."""
    n_total, d = weight.shape
    bp = rows.shape[0]
    grid = (bp // tile_b,)
    itemsize = jnp.dtype(weight.dtype).itemsize
    table_bytes = n_total * d * itemsize
    gathered_bytes = bp * d * itemsize

    def kernel(idx_ref, table_ref, out_ref):
        base = pl.program_id(0) * tile_b

        def body(r, carry):
            row = idx_ref[base + r]
            out_ref[pl.ds(r, 1), :] = table_ref[pl.ds(row, 1), :]
            return carry

        # Unrolled so SMEM index loads, scalar address math and the row
        # copies interleave across iterations (loop overhead / scalar-slot
        # bound otherwise).
        lax.fori_loop(0, tile_b, body, 0, unroll=8)

    # v7x megacore: with "parallel" each TensorCore streams its OWN copy of
    # the table into its VMEM.  Only shard across cores when the gathered
    # bytes dominate a second table stream; otherwise keep one core.
    dim_sem = ("parallel",) if gathered_bytes >= 2 * table_bytes else ("arbitrary",)

    out_tile_bytes = tile_b * d * itemsize
    return pl.pallas_call(
        kernel,
        grid_spec=pltpu.PrefetchScalarGridSpec(
            num_scalar_prefetch=1,
            grid=grid,
            # Constant block index -> the table is DMA'd HBM->VMEM exactly
            # once.  Single-buffered: double-buffering a constant block buys
            # nothing and would double its VMEM footprint.
            in_specs=[pl.BlockSpec((n_total, d), lambda i, idx: (0, 0),
                                   pipeline_mode=pl.Buffered(1))],
            out_specs=pl.BlockSpec((tile_b, d), lambda i, idx: (i, 0)),
        ),
        out_shape=jax.ShapeDtypeStruct((bp, d), weight.dtype),
        compiler_params=pltpu.CompilerParams(
            dimension_semantics=dim_sem,
            # Single-buffered table + double-buffered output tile + headroom.
            vmem_limit_bytes=int(table_bytes + 2 * out_tile_bytes + (8 << 20)),
        ),
    )(rows, weight)


# --------------- Path 3: manual double-buffered HBM gather -------------------

def _gather_dma(weight, rows, tile_b, n_splits):
    """rows are absolute, in-bounds table rows; rows.shape[0] is a multiple of
    tile_b * n_splits."""
    n_total, d = weight.shape
    bp = rows.shape[0]
    steps_total = bp // tile_b
    assert steps_total % n_splits == 0
    inner = steps_total // n_splits
    grid = (n_splits, inner)

    def kernel(idx_ref, w_hbm, out_ref, buf, sems):
        c = pl.program_id(0)
        i = pl.program_id(1)

        def issue(step_i, slot):
            base = (c * inner + step_i) * tile_b

            def body(r, carry):
                row = idx_ref[base + r]
                pltpu.make_async_copy(
                    w_hbm.at[pl.ds(row, 1)],           # (1, d) row in HBM
                    buf.at[slot, pl.ds(r, 1)],         # (1, d) row in VMEM
                    sems.at[slot],
                ).start()
                return carry

            # Unrolled: per-row descriptor issue is bound by scalar address
            # math + the single vector-misc slot; exposing the loop lets the
            # scheduler interleave index loads / address computes / pushes.
            lax.fori_loop(0, tile_b, body, 0, unroll=8)

        # Prime on the first inner step of this split, then always prefetch
        # step i+1 while step i's rows are consumed (cross-step state ->
        # the inner axis is "arbitrary").
        @pl.when(i == 0)
        def _():
            issue(0, 0)

        @pl.when(i + 1 < inner)
        def _():
            issue(i + 1, (i + 1) % 2)

        slot = i % 2

        # ONE aggregate wait: DMA semaphores count bytes, and this (tile_b, d)
        # descriptor's byte count equals the sum of the tile_b row copies
        # issued on sems[slot] for this step.  Replaces tile_b serialized
        # .wait() calls (each of which also breaks SMEM sst->sld forwarding).
        pltpu.make_async_copy(buf.at[slot], buf.at[slot], sems.at[slot]).wait()

        # (tile_b, d) sublane/lane-dense store -> unmasked vst, one writeback
        # DMA per tile.  (A raw-HBM out spec + direct DMA would skip this
        # VMEM->VMEM hop; minor once the wait loop is collapsed.)
        out_ref[...] = buf[slot]

    return pl.pallas_call(
        kernel,
        grid_spec=pltpu.PrefetchScalarGridSpec(
            num_scalar_prefetch=1,
            grid=grid,
            in_specs=[pl.BlockSpec(memory_space=pl.ANY)],   # weight stays in HBM
            out_specs=pl.BlockSpec((tile_b, d),
                                   lambda c, i, idx: (c * inner + i, 0)),
            scratch_shapes=[
                pltpu.VMEM((2, tile_b, d), weight.dtype),   # double buffer
                pltpu.SemaphoreType.DMA((2,)),              # one sem per slot
            ],
        ),
        out_shape=jax.ShapeDtypeStruct((bp, d), weight.dtype),
        compiler_params=pltpu.CompilerParams(
            # Leading axis shards the row range across TensorCores (v7x);
            # on single-TC parts it just iterates sequentially.  Inner axis
            # carries the cross-step prefetch -> "arbitrary".
            dimension_semantics=("parallel", "arbitrary"),
        ),
    )(rows, weight)


# ------------------------------ dispatcher ------------------------------------

def embedding_gather(weight, indices, row_offset, slab_size, *,
                     tile_b=None, force_dma=False):
    """Returns weight[row_offset + indices, :] using a Pallas TPU kernel.

    weight:     (N_total, D) float32, D multiple of 128 (lane-aligned).
    indices:    (B,) int32, indices relative to `row_offset`.
    row_offset: python int, start row of the node-type slab.
    slab_size:  python int, number of rows in the node-type slab.
    """
    b = int(indices.shape[0])
    n_total, d = weight.shape
    itemsize = jnp.dtype(weight.dtype).itemsize
    table_bytes = n_total * d * itemsize

    # Path selection: go resident only when the table fits the single-buffered
    # VMEM budget AND the gathered bytes are a meaningful fraction of the
    # table stream.  Otherwise streaming the whole table HBM->VMEM to pick B
    # rows costs far more HBM traffic than B per-row DMAs.
    gathered_bytes = max(b, 1) * d * itemsize
    use_resident = (
        (not force_dma)
        and table_bytes <= _vmem_budget_bytes()
        and 8 * gathered_bytes >= table_bytes
    )

    if tile_b is None:
        tile_b = 512 if use_resident else 256   # amortize ~0.35 us/step overhead
    tile_b = max(8, _round_up(int(tile_b), 8))
    tile_b = min(tile_b, _round_up(max(b, 1), 8))

    # Megacore split of the row range for the DMA path (leading "parallel"
    # axis of 2 when there are >= 2 steps; harmless on single-TC parts).
    n_splits = 1
    if not use_resident and _round_up(max(b, 1), tile_b) // tile_b >= 2:
        n_splits = 2

    bp = _round_up(max(b, 1), tile_b * n_splits)

    # Clamp to the node-type slab (PyTorch would raise on OOB; here we clamp
    # so no DMA can ever leave the table), add the slab offset, pad to bp.
    # Padded rows gather a valid in-slab row and are sliced off below.
    rows = row_offset + jnp.clip(indices.astype(jnp.int32), 0, slab_size - 1)
    rows = jnp.pad(rows, (0, bp - b), constant_values=row_offset)

    if use_resident:
        out = _gather_resident(weight, rows, tile_b)
    else:
        out = _gather_dma(weight, rows, tile_b, n_splits)
    return out[:b]


# ------------------------- Metapath2vec (JAX side) ---------------------------

class Metapath2vecPallas:
    """JAX/Pallas re-implementation of the forward pass of Metapath2vec.

    Only the embedding table + node-type bookkeeping (start/end/offset) are
    needed for forward().
    # TODO(synk): pos_sample/neg_sample/loader (SparseTensor neighbor sampling,
    # DataLoader) and test() (sklearn LogisticRegression) have no clean Pallas
    # equivalent and are not part of forward(); omitted.
    """

    def __init__(self, embedding_dim, metapath, walk_length, context_size,
                 num_nodes_dict, *, walks_per_node=1, num_negative_samples=1,
                 key=None):
        assert metapath[0][0] == metapath[-1][-1]
        assert walk_length >= context_size

        self.embedding_dim = embedding_dim
        self.metapath = metapath
        self.walk_length = walk_length
        self.context_size = context_size
        self.walks_per_node = walks_per_node
        self.num_negative_samples = num_negative_samples
        self.num_nodes_dict = num_nodes_dict

        types = set(x[0] for x in metapath) | set(x[-1] for x in metapath)
        types = sorted(list(types))

        count = 0
        self.start, self.end = {}, {}
        for k in types:
            self.start[k] = count
            count += num_nodes_dict[k]
            self.end[k] = count

        offset = [self.start[metapath[0][0]]]
        offset += [self.start[keys[-1]] for keys in metapath] * int(
            walk_length / len(metapath) + 1)
        offset = offset[:walk_length + 1]
        assert len(offset) == walk_length + 1
        self.offset = jnp.asarray(offset, dtype=jnp.int32)

        # torch.nn.Embedding.reset_parameters() -> N(0, 1) init.
        if key is None:
            key = jax.random.PRNGKey(0)
        self.weight = jax.random.normal(
            key, (count, embedding_dim), dtype=jnp.float32)

    def forward(self, node_type, batch=None, *, force_dma=False):
        """Embeddings for nodes of `node_type`, optionally indexed by `batch`."""
        start = self.start[node_type]
        end = self.end[node_type]
        slab = end - start
        if batch is None:
            # Contiguous slab: a static slice is a pure contiguous HBM copy
            # that XLA runs at roofline; a row-gather kernel is strictly slower.
            return lax.slice(self.weight, (start, 0), (end, self.embedding_dim))
        batch = jnp.asarray(batch, dtype=jnp.int32)
        return embedding_gather(self.weight, batch, start, slab,
                                force_dma=force_dma)

    __call__ = forward


# ---------------------------------- main -------------------------------------

if __name__ == "__main__":
    key = jax.random.PRNGKey(0)
    k_emb, k_b1, k_b2 = jax.random.split(key, 3)

    # Small heterogeneous graph: authors <-> papers.
    metapath = [
        ("author", "writes", "paper"),
        ("paper", "written_by", "author"),
    ]
    num_nodes_dict = {"author": 20, "paper": 30}
    embedding_dim = 128          # lane-aligned
    walk_length = 4
    context_size = 3

    model = Metapath2vecPallas(
        embedding_dim=embedding_dim,
        metapath=metapath,
        walk_length=walk_length,
        context_size=context_size,
        num_nodes_dict=num_nodes_dict,
        key=k_emb,
    )

    s_a, e_a = model.start["author"], model.end["author"]
    s_p, e_p = model.start["paper"], model.end["paper"]

    # Path 2: VMEM-resident, single-buffered table gather (default for this
    # tiny table and a batch that is a meaningful fraction of it).
    batch = jax.random.randint(
        k_b1, (8,), 0, num_nodes_dict["author"], dtype=jnp.int32)
    out = jax.block_until_ready(model("author", batch))

    # Path 3: manual double-buffered HBM DMA gather (general path), forced.
    # Ragged batch (37, not a multiple of 8 or 16) + small tile so padding,
    # the megacore split (grid (2, 3)), the cross-step prefetch and the
    # aggregate wait all run.
    batch2 = jax.random.randint(
        k_b2, (37,), 0, num_nodes_dict["author"], dtype=jnp.int32)
    out_dma = jax.block_until_ready(
        embedding_gather(model.weight, batch2, s_a, num_nodes_dict["author"],
                         tile_b=8, force_dma=True))

    # Path 1: batch=None -> full node-type slab (contiguous copy).
    out_full = jax.block_until_ready(model("paper"))

    # Reference semantics (plain JAX), matching the PyTorch forward exactly.
    ref = model.weight[s_a:e_a][batch]
    ref_dma = model.weight[s_a:e_a][batch2]
    ref_full = model.weight[s_p:e_p]

    assert out.shape == (8, embedding_dim) and out.dtype == jnp.float32
    assert out_dma.shape == (37, embedding_dim)
    assert out_full.shape == (num_nodes_dict["paper"], embedding_dim)
    assert bool(jnp.array_equal(out, ref))          # gathers are bit-exact
    assert bool(jnp.array_equal(out_dma, ref_dma))
    assert bool(jnp.array_equal(out_full, ref_full))

    print("KERNEL_OK")
</pallas_src>

<mosaic_0001>
module attributes {stable_mosaic.version = 11 : i64} {
  func.func @kernel(%arg0: i32, %arg1: memref<8xi32, #tpu.memory_space<smem>>, %arg2: memref<50x128xf32, #tpu.memory_space<vmem>>, %arg3: memref<8x128xf32, #tpu.memory_space<vmem>>) attributes {dimension_semantics = [#tpu.dimension_semantics<arbitrary>], iteration_bounds = array<i64: 1>, scalar_prefetch = 1 : i64, scratch_operands = 0 : i64, tpu.core_type = #tpu.core_type<tc>, window_params = [{pipeline_mode = #tpu.pipeline_mode<synchronous>, transform_indices = @transform_0, window_bounds = array<i64: 50, 128>}, {transform_indices = @transform_1, window_bounds = array<i64: 8, 128>}]} {
    %c8_i32 = arith.constant 8 : i32
    %0 = arith.muli %arg0, %c8_i32 : i32
    %c0_i32 = arith.constant 0 : i32
    %1 = arith.addi %0, %c0_i32 : i32
    %2 = arith.index_cast %1 : i32 to index
    %3 = memref.load %arg1[%2] : memref<8xi32, #tpu.memory_space<smem>>
    %4 = arith.index_cast %3 : i32 to index
    %c0 = arith.constant 0 : index
    %5 = vector.load %arg2[%4, %c0] : memref<50x128xf32, #tpu.memory_space<vmem>>, vector<1x128xf32>
    %6 = arith.index_cast %c0_i32 : i32 to index
    %c0_0 = arith.constant 0 : index
    %7 = vector.load %arg3[%6, %c0_0] : memref<8x128xf32, #tpu.memory_space<vmem>>, vector<1x128xf32>
    tpu.vector_store %arg3[%6, %c0_0], %5 {strides = array<i32>} : memref<8x128xf32, #tpu.memory_space<vmem>>, vector<1x128xf32>,
    %c1_i32 = arith.constant 1 : i32
    %8 = arith.addi %0, %c1_i32 : i32
    %9 = arith.index_cast %8 : i32 to index
    %10 = memref.load %arg1[%9] : memref<8xi32, #tpu.memory_space<smem>>
    %11 = arith.index_cast %10 : i32 to index
    %c0_1 = arith.constant 0 : index
    %12 = vector.load %arg2[%11, %c0_1] : memref<50x128xf32, #tpu.memory_space<vmem>>, vector<1x128xf32>
    %13 = arith.index_cast %c1_i32 : i32 to index
    %c0_2 = arith.constant 0 : index
    %14 = vector.load %arg3[%13, %c0_2] : memref<8x128xf32, #tpu.memory_space<vmem>>, vector<1x128xf32>
    tpu.vector_store %arg3[%13, %c0_2], %12 {strides = array<i32>} : memref<8x128xf32, #tpu.memory_space<vmem>>, vector<1x128xf32>,
    %c2_i32 = arith.constant 2 : i32
    %15 = arith.addi %0, %c2_i32 : i32
    %16 = arith.index_cast %15 : i32 to index
    %17 = memref.load %arg1[%16] : memref<8xi32, #tpu.memory_space<smem>>
    %18 = arith.index_cast %17 : i32 to index
    %c0_3 = arith.constant 0 : index
    %19 = vector.load %arg2[%18, %c0_3] : memref<50x128xf32, #tpu.memory_space<vmem>>, vector<1x128xf32>
    %20 = arith.index_cast %c2_i32 : i32 to index
    %c0_4 = arith.constant 0 : index
    %21 = vector.load %arg3[%20, %c0_4] : memref<8x128xf32, #tpu.memory_space<vmem>>, vector<1x128xf32>
    tpu.vector_store %arg3[%20, %c0_4], %19 {strides = array<i32>} : memref<8x128xf32, #tpu.memory_space<vmem>>, vector<1x128xf32>,
    %c3_i32 = arith.constant 3 : i32
    %22 = arith.addi %0, %c3_i32 : i32
    %23 = arith.index_cast %22 : i32 to index
    %24 = memref.load %arg1[%23] : memref<8xi32, #tpu.memory_space<smem>>
    %25 = arith.index_cast %24 : i32 to index
    %c0_5 = arith.constant 0 : index
    %26 = vector.load %arg2[%25, %c0_5] : memref<50x128xf32, #tpu.memory_space<vmem>>, vector<1x128xf32>
    %27 = arith.index_cast %c3_i32 : i32 to index
    %c0_6 = arith.constant 0 : index
    %28 = vector.load %arg3[%27, %c0_6] : memref<8x128xf32, #tpu.memory_space<vmem>>, vector<1x128xf32>
    tpu.vector_store %arg3[%27, %c0_6], %26 {strides = array<i32>} : memref<8x128xf32, #tpu.memory_space<vmem>>, vector<1x128xf32>,
    %c4_i32 = arith.constant 4 : i32
    %29 = arith.addi %0, %c4_i32 : i32
    %30 = arith.index_cast %29 : i32 to index
    %31 = memref.load %arg1[%30] : memref<8xi32, #tpu.memory_space<smem>>
    %32 = arith.index_cast %31 : i32 to index
    %c0_7 = arith.constant 0 : index
    %33 = vector.load %arg2[%32, %c0_7] : memref<50x128xf32, #tpu.memory_space<vmem>>, vector<1x128xf32>
    %34 = arith.index_cast %c4_i32 : i32 to index
    %c0_8 = arith.constant 0 : index
    %35 = vector.load %arg3[%34, %c0_8] : memref<8x128xf32, #tpu.memory_space<vmem>>, vector<1x128xf32>
    tpu.vector_store %arg3[%34, %c0_8], %33 {strides = array<i32>} : memref<8x128xf32, #tpu.memory_space<vmem>>, vector<1x128xf32>,
    %c5_i32 = arith.constant 5 : i32
    %36 = arith.addi %0, %c5_i32 : i32
    %37 = arith.index_cast %36 : i32 to index
    %38 = memref.load %arg1[%37] : memref<8xi32, #tpu.memory_space<smem>>
    %39 = arith.index_cast %38 : i32 to index
    %c0_9 = arith.constant 0 : index
    %40 = vector.load %arg2[%39, %c0_9] : memref<50x128xf32, #tpu.memory_space<vmem>>, vector<1x128xf32>
    %41 = arith.index_cast %c5_i32 : i32 to index
    %c0_10 = arith.constant 0 : index
    %42 = vector.load %arg3[%41, %c0_10] : memref<8x128xf32, #tpu.memory_space<vmem>>, vector<1x128xf32>
    tpu.vector_store %arg3[%41, %c0_10], %40 {strides = array<i32>} : memref<8x128xf32, #tpu.memory_space<vmem>>, vector<1x128xf32>,
    %c6_i32 = arith.constant 6 : i32
    %43 = arith.addi %0, %c6_i32 : i32
    %44 = arith.index_cast %43 : i32 to index
    %45 = memref.load %arg1[%44] : memref<8xi32, #tpu.memory_space<smem>>
    %46 = arith.index_cast %45 : i32 to index
    %c0_11 = arith.constant 0 : index
    %47 = vector.load %arg2[%46, %c0_11] : memref<50x128xf32, #tpu.memory_space<vmem>>, vector<1x128xf32>
    %48 = arith.index_cast %c6_i32 : i32 to index
    %c0_12 = arith.constant 0 : index
    %49 = vector.load %arg3[%48, %c0_12] : memref<8x128xf32, #tpu.memory_space<vmem>>, vector<1x128xf32>
    tpu.vector_store %arg3[%48, %c0_12], %47 {strides = array<i32>} : memref<8x128xf32, #tpu.memory_space<vmem>>, vector<1x128xf32>,
    %c7_i32 = arith.constant 7 : i32
    %50 = arith.addi %0, %c7_i32 : i32
    %51 = arith.index_cast %50 : i32 to index
    %52 = memref.load %arg1[%51] : memref<8xi32, #tpu.memory_space<smem>>
    %53 = arith.index_cast %52 : i32 to index
    %c0_13 = arith.constant 0 : index
    %54 = vector.load %arg2[%53, %c0_13] : memref<50x128xf32, #tpu.memory_space<vmem>>, vector<1x128xf32>
    %55 = arith.index_cast %c7_i32 : i32 to index
    %c0_14 = arith.constant 0 : index
    %56 = vector.load %arg3[%55, %c0_14] : memref<8x128xf32, #tpu.memory_space<vmem>>, vector<1x128xf32>
    tpu.vector_store %arg3[%55, %c0_14], %54 {strides = array<i32>} : memref<8x128xf32, #tpu.memory_space<vmem>>, vector<1x128xf32>,
    %c8_i32_15 = arith.constant 8 : i32
    return
  }
  func.func @transform_0(%arg0: i32, %arg1: memref<8xi32, #tpu.memory_space<smem>>) -> (i32, i32) {
    %c0_i32 = arith.constant 0 : i32
    %c0_i32_0 = arith.constant 0 : i32
    %c0_i32_1 = arith.constant 0 : i32
    return %c0_i32, %c0_i32_0 : i32, i32
  }
  func.func @transform_1(%arg0: i32, %arg1: memref<8xi32, #tpu.memory_space<smem>>) -> (i32, i32) {
    %c0_i32 = arith.constant 0 : i32
    %c0_i32_0 = arith.constant 0 : i32
    return %arg0, %c0_i32 : i32, i32
  }
}

</mosaic_0001>

<llo_original>
// kernel: tpu_custom_call.1
$region0: #{tpu_custom_call.1}
  #allocation0 [shape = 'u32[]', space=smem, size = 0x4, offset = 0x4, fixed_abs, tag = 'smem constant byte address 0x4 - core index']
  #allocation1 [shape = 'u32[144,128]{1,0:T(1,128)}', space=vmem, size = 0x12000, scoped, tag = 'internal scratch']
  #allocation2 [shape = 's32[1]{0}', space=sflag, size = 0x4, scoped, tag = 'scoped memory for tpu_custom_call.1']
  #allocation3 [shape = 'u8[512]{0}', space=smem, size = 0x200, scoped, tag = 'prefetched SMEM operand 0']
  %s0 = inlined_call_operand.hbm [shape: s32[8], index: 0, kind: input, shape index: {}]
  %s1 = inlined_call_operand.hbm [shape: f32[50,128], index: 1, kind: input, shape index: {}]
  %s2 = inlined_call_operand.hbm [shape: f32[8,128], index: 2, kind: output, shape index: {}]
  %s3 = sld [smem:[#allocation0]]
  $region18: #{tpu_custom_call.1} parent=0
    _
  %s5 = ssub.s32 1, %s3
  %s6 = scalar_select 0, %s5, %s3
  %8 = dma.hbm_to_smem %s0, 16, [#allocation3], [#allocation2]
  %9 = dma.done [#allocation2], 16
  %10 = sfence
  $region1: #{tpu_custom_call.1} parent=0
    #allocation4 [shape = 'u8[28672]{0}', space=vmem, size = 0x7000, scoped, tag = 'input window, operand 1, single buffered']
    #allocation5 [shape = 's32[1]{0}', space=sflag, size = 0x4, scoped, tag = 'scoped memory for tpu_custom_call.1']
    #allocation6 [shape = 's32[1]{0}', space=sflag, size = 0x4, scoped, tag = 'scoped memory for tpu_custom_call.1']
    #allocation7 [shape = 'u8[4096]{0}', space=vmem, size = 0x1000, scoped, tag = 'output window, operand 0, single buffered']
    %11 = vsyncpa [#allocation5], 0
    %12 = vsyncpa [#allocation6], 0
    // Predicated region
    $region2: #{tpu_custom_call.1} parent=1 // pred_check
      _
    $region3: #{tpu_custom_call.1} parent=1 // pred_check_branch
      %14 = sbr.rel (0) target = $region5
    $region4: #{tpu_custom_call.1} parent=1 // pred_region
      %s16 = ssub.s32 896, 896
      %17 = vsyncadd [#allocation5], %s16
      %s18 = sshll.u32 [#allocation4], 4
      %s19 = int_to_ptr.vmem [resolvable:$true] %s18
      %24 = dma.hbm_to_vmem [thread:$0]  %s1, 896, %s19, [#allocation5], 128, 128, 8
    $region5: #{tpu_custom_call.1} parent=1 // pred_fallthru
      _
    // Predicated region
    $region6: #{tpu_custom_call.1} parent=1 // pred_check
      _
    $region7: #{tpu_custom_call.1} parent=1 // pred_check_branch
      %26 = sbr.rel (0) target = $region9
    $region8: #{tpu_custom_call.1} parent=1 // pred_region
      %27 = dma.done [#allocation5], 896
    $region9: #{tpu_custom_call.1} parent=1 // pred_fallthru
      _
    %s28 = smul.u32 0, 8
    %s29 = sld [smem:[#allocation3 + %s28]]
    %s30 = scalar_lea.vmem [#allocation4], %s29
    %v31 = vld [vmem:[%s30] sm:$0x1]
    %32 = vst [vmem:[#allocation7] sm:$0x1] %v31
    %s33 = sadd.s32 %s28, 1
    %s34 = sld [smem:[#allocation3 + %s33]]
    %s35 = scalar_lea.vmem [#allocation4], %s34
    %v36 = vld [vmem:[%s35] sm:$0x1]
    %37 = vst [vmem:[#allocation7 + $0x1] sm:$0x1] %v36
    %s38 = sadd.s32 %s28, 2
    %s39 = sld [smem:[#allocation3 + %s38]]
    %s40 = scalar_lea.vmem [#allocation4], %s39
    %v41 = vld [vmem:[%s40] sm:$0x1]
    %42 = vst [vmem:[#allocation7 + $0x2] sm:$0x1] %v41
    %s43 = sadd.s32 %s28, 3
    %s44 = sld [smem:[#allocation3 + %s43]]
    %s45 = scalar_lea.vmem [#allocation4], %s44
    %v46 = vld [vmem:[%s45] sm:$0x1]
    %47 = vst [vmem:[#allocation7 + $0x3] sm:$0x1] %v46
    %s48 = sadd.s32 %s28, 4
    %s49 = sld [smem:[#allocation3 + %s48]]
    %s50 = scalar_lea.vmem [#allocation4], %s49
    %v51 = vld [vmem:[%s50] sm:$0x1]
    %52 = vst [vmem:[#allocation7 + $0x4] sm:$0x1] %v51
    %s53 = sadd.s32 %s28, 5
    %s54 = sld [smem:[#allocation3 + %s53]]
    %s55 = scalar_lea.vmem [#allocation4], %s54
    %v56 = vld [vmem:[%s55] sm:$0x1]
    %57 = vst [vmem:[#allocation7 + $0x5] sm:$0x1] %v56
    %s58 = sadd.s32 %s28, 6
    %s59 = sld [smem:[#allocation3 + %s58]]
    %s60 = scalar_lea.vmem [#allocation4], %s59
    %v61 = vld [vmem:[%s60] sm:$0x1]
    %62 = vst [vmem:[#allocation7 + $0x6] sm:$0x1] %v61
    %s63 = sadd.s32 %s28, 7
    %s64 = sld [smem:[#allocation3 + %s63]]
    %s65 = scalar_lea.vmem [#allocation4], %s64
    %v66 = vld [vmem:[%s65] sm:$0x1]
    %67 = vst [vmem:[#allocation7 + $0x7] sm:$0x1] %v66
    // Predicated region
    $region10: #{tpu_custom_call.1} parent=1 // pred_check
      _
    $region11: #{tpu_custom_call.1} parent=1 // pred_check_branch
      %69 = sbr.rel (0) target = $region13
    $region12: #{tpu_custom_call.1} parent=1 // pred_region
      %s71 = ssub.s32 128, 128
      %72 = vsyncadd [#allocation6], %s71
      %s74 = sshll.u32 [#allocation7], 4
      %s75 = int_to_ptr.vmem [resolvable:$true] %s74
      %77 = dma.vmem_to_hbm [thread:$0]  %s75, 128, %s2, [#allocation6]
    $region13: #{tpu_custom_call.1} parent=1 // pred_fallthru
      _
    // Predicated region
    $region14: #{tpu_custom_call.1} parent=1 // pred_check
      _
    $region15: #{tpu_custom_call.1} parent=1 // pred_check_branch
      %79 = sbr.rel (0) target = $region17
    $region16: #{tpu_custom_call.1} parent=1 // pred_region
      %80 = dma.done [#allocation6], 128
    $region17: #{tpu_custom_call.1} parent=1 // pred_fallthru
      _
    %81 = vsyncpa [#allocation5], 1
    %82 = vsyncpa [#allocation6], 1

</llo_original>
